<compile_context>
chip_gen: v5e
topology: v5e:2x2
jax: 0.10.0
libtpu: 0.0.40
codegen_flags: <defaults>
</compile_context>

<pallas_src>
import functools
import math

import jax
import jax.numpy as jnp
from jax.experimental import pallas as pl
from jax.experimental.pallas import tpu as pltpu


LANE = 128      # feature-dim padding target (128 lanes; use 256-mult tiles when tiling for v6e/v7x)
SUBLANE = 8     # f32 sublane tiling for the batch dim


def _round_up(x: int, m: int) -> int:
    return ((x + m - 1) // m) * m


def _fused_mlp_kernel(x_ref, w_ref, b_ref, o_ref, act_ref, *, m, k_in, out_dim):
    """One grid step per layer; the f32 activation stays resident in VMEM.

    x_ref:   (m, k_in)            f32, unpadded input (resident, DMA'd once)
    w_ref:   (d_pad, d_pad)       bf16, this layer's zero-padded weights
    b_ref:   (L, 1, d_pad)        f32, whole bias stack (resident)
    o_ref:   (m, out_dim)         true-shaped output (written on last step)
    act_ref: (m_pad, d_pad)       f32 running activation (scratch)
    """
    layer = pl.program_id(0)
    last = pl.num_programs(0) - 1

    # Layer 0: zero-extend the unpadded input into the padded activation
    # buffer (padded lanes/rows are exactly 0, so they contribute nothing).
    @pl.when(layer == 0)
    def _():
        act_ref[...] = jnp.zeros_like(act_ref)
        act_ref[:m, :k_in] = x_ref[...].astype(jnp.float32)

    # y = act @ W_l + b_l : bf16 inputs on the MXU, f32 accumulation.
    y = jnp.dot(act_ref[...].astype(jnp.bfloat16), w_ref[...],
                preferred_element_type=jnp.float32)
    y = y + b_ref[layer]                       # (1, d_pad) broadcast over rows

    # Hidden layers feed ReLU(y) forward; skipped entirely on the last layer.
    @pl.when(layer < last)
    def _():
        act_ref[...] = jnp.maximum(y, 0.0)

    # Last layer: emit only the true (m, out_dim) block, pre-ReLU.
    @pl.when(layer == last)
    def _():
        o_ref[...] = y[:m, :out_dim].astype(o_ref.dtype)


def init_mlp_params(key, dimensions):
    """Mirrors nn.Linear default init (uniform +/- 1/sqrt(fan_in)).

    Weights stored as (in_features, out_features) so the kernel computes
    y = x @ W + b directly on the MXU."""
    params = []
    for i in range(len(dimensions) - 1):
        fan_in, fan_out = dimensions[i], dimensions[i + 1]
        key, kw, kb = jax.random.split(key, 3)
        bound = 1.0 / math.sqrt(fan_in)
        w = jax.random.uniform(kw, (fan_in, fan_out), jnp.float32, -bound, bound)
        b = jax.random.uniform(kb, (fan_out,), jnp.float32, -bound, bound)
        params.append((w, b))
    return params


def pack_mlp_params(params):
    """Zero-pad every layer to (d_pad, d_pad) bf16 / (1, d_pad) f32 and stack.

    Done once at parameter-pack time; zero padding is numerically free.
    TODO(synk): per-layer (K_l, N_l) padding + flat offset-indexed buffer for
    mixed-width production MLPs (avoids max(dim)^2 DMA/FLOP waste)."""
    dims = [params[0][0].shape[0]] + [w.shape[1] for w, _ in params]
    d_pad = _round_up(max(dims), LANE)
    n_layers = len(params)
    w_stack = jnp.zeros((n_layers, d_pad, d_pad), jnp.bfloat16)
    b_stack = jnp.zeros((n_layers, 1, d_pad), jnp.float32)
    for i, (w, b) in enumerate(params):
        k, n = w.shape
        w_stack = w_stack.at[i, :k, :n].set(w.astype(jnp.bfloat16))
        b_stack = b_stack.at[i, 0, :n].set(b)
    return w_stack, b_stack


@functools.partial(jax.jit, static_argnames=("out_dim",))
def mlp_forward(x, w_stack, b_stack, *, out_dim: int):
    """Fused MLP forward: one pallas_call, one grid step per layer."""
    m, k_in = x.shape
    n_layers, d_pad, _ = w_stack.shape
    m_pad = _round_up(m, SUBLANE)

    kernel = functools.partial(_fused_mlp_kernel, m=m, k_in=k_in, out_dim=out_dim)

    return pl.pallas_call(
        kernel,
        out_shape=jax.ShapeDtypeStruct((m, out_dim), x.dtype),
        grid_spec=pltpu.PrefetchScalarGridSpec(
            num_scalar_prefetch=0,
            grid=(n_layers,),
            in_specs=[
                # unpadded input, resident (constant block index -> single DMA)
                pl.BlockSpec((m, k_in), lambda l: (0, 0)),
                # this layer's padded bf16 weights (pipelined across layers)
                pl.BlockSpec((None, d_pad, d_pad), lambda l: (l, 0, 0)),
                # whole bias stack, resident in VMEM
                pl.BlockSpec((n_layers, 1, d_pad), lambda l: (0, 0, 0)),
            ],
            out_specs=pl.BlockSpec((m, out_dim), lambda l: (0, 0)),
            scratch_shapes=[pltpu.VMEM((m_pad, d_pad), jnp.float32)],
        ),
        compiler_params=pltpu.CompilerParams(
            dimension_semantics=("arbitrary",),   # layer axis is sequential
        ),
    )(x, w_stack, b_stack)


def mlp_reference(x, params):
    """Same math as the PyTorch module, with the kernel's bf16 weight/input
    storage for the matmuls (f32 accumulation, f32 bias/ReLU)."""
    n_layers = len(params)
    for li, (w, b) in enumerate(params):
        x = jnp.dot(x.astype(jnp.bfloat16), w.astype(jnp.bfloat16),
                    preferred_element_type=jnp.float32) + b
        if li < n_layers - 1:
            x = jnp.maximum(x, 0.0)
    return x


if __name__ == "__main__":
    dimensions = [32, 64, 48, 16]   # MLP([32, 64, 48, 16])
    batch = 8

    key = jax.random.PRNGKey(0)
    key, kx = jax.random.split(key)
    x = jax.random.normal(kx, (batch, dimensions[0]), jnp.float32)

    params = init_mlp_params(key, dimensions)
    w_stack, b_stack = pack_mlp_params(params)   # padding/stacking hoisted here

    out = mlp_forward(x, w_stack, b_stack, out_dim=dimensions[-1])
    out = jax.block_until_ready(out)

    ref = mlp_reference(x, params)
    assert out.shape == (batch, dimensions[-1])
    assert jnp.allclose(out, ref, atol=2e-3, rtol=2e-3), "mismatch vs reference"

    print("KERNEL_OK")
</pallas_src>

<mosaic_0001>
module attributes {stable_mosaic.version = 11 : i64} {
  func.func @_fused_mlp_kernel(%arg0: i32, %arg1: memref<8x32xf32, #tpu.memory_space<vmem>>, %arg2: memref<1x128x128xbf16, #tpu.memory_space<vmem>>, %arg3: memref<3x1x128xf32, #tpu.memory_space<vmem>>, %arg4: memref<8x16xf32, #tpu.memory_space<vmem>>, %arg5: memref<8x128xf32, #tpu.memory_space<vmem>>) attributes {dimension_semantics = [#tpu.dimension_semantics<arbitrary>], iteration_bounds = array<i64: 3>, scalar_prefetch = 0 : i64, scratch_operands = 1 : i64, tpu.core_type = #tpu.core_type<tc>, window_params = [{pipeline_mode = #tpu.pipeline_mode<synchronous>, transform_indices = @transform_0, window_bounds = array<i64: 8, 32>}, {transform_indices = @transform_1, window_bounds = array<i64: 1, 128, 128>}, {pipeline_mode = #tpu.pipeline_mode<synchronous>, transform_indices = @transform_2, window_bounds = array<i64: 3, 1, 128>}, {pipeline_mode = #tpu.pipeline_mode<synchronous>, transform_indices = @transform_3, window_bounds = array<i64: 8, 16>}]} {
    %c0_i32 = arith.constant 0 : i32
    %0 = arith.cmpi eq, %arg0, %c0_i32 : i32
    %1 = arith.extui %0 : i1 to i32
    %c0_i32_0 = arith.constant 0 : i32
    %2 = arith.cmpi ne, %1, %c0_i32_0 : i32
    scf.if %2 {
      %cst_10 = arith.constant 0.000000e+00 : f32
      %19 = vector.broadcast %cst_10 : f32 to vector<8x128xf32>
      %c0_11 = arith.constant 0 : index
      %c0_12 = arith.constant 0 : index
      %20 = vector.load %arg5[%c0_11, %c0_12] : memref<8x128xf32, #tpu.memory_space<vmem>>, vector<8x128xf32>
      tpu.vector_store %arg5[%c0_11, %c0_12], %19 {strides = array<i32>} : memref<8x128xf32, #tpu.memory_space<vmem>>, vector<8x128xf32>,
      %c0_13 = arith.constant 0 : index
      %c0_14 = arith.constant 0 : index
      %21 = vector.load %arg1[%c0_13, %c0_14] : memref<8x32xf32, #tpu.memory_space<vmem>>, vector<8x32xf32>
      %c0_15 = arith.constant 0 : index
      %c0_16 = arith.constant 0 : index
      %22 = vector.load %arg5[%c0_15, %c0_16] : memref<8x128xf32, #tpu.memory_space<vmem>>, vector<8x32xf32>
      tpu.vector_store %arg5[%c0_15, %c0_16], %21 {strides = array<i32>} : memref<8x128xf32, #tpu.memory_space<vmem>>, vector<8x32xf32>,
    } else {
    }
    %c0 = arith.constant 0 : index
    %c0_1 = arith.constant 0 : index
    %3 = vector.load %arg5[%c0, %c0_1] : memref<8x128xf32, #tpu.memory_space<vmem>>, vector<8x128xf32>
    %4 = arith.truncf %3 : vector<8x128xf32> to vector<8x128xbf16>
    %c0_2 = arith.constant 0 : index
    %c0_3 = arith.constant 0 : index
    %c0_4 = arith.constant 0 : index
    %5 = vector.load %arg2[%c0_2, %c0_3, %c0_4] : memref<1x128x128xbf16, #tpu.memory_space<vmem>>, vector<1x128x128xbf16>
    %6 = vector.shape_cast %5 : vector<1x128x128xbf16> to vector<128x128xbf16>
    %cst = arith.constant dense<0.000000e+00> : vector<8x128xf32>
    %7 = tpu.matmul %4, %6, %cst {dimension_numbers = #tpu.dot_dimension_numbers<[1], [0], [0], [1], [0, 0, 1, 1], [], []>} : vector<8x128xbf16>, vector<128x128xbf16>, vector<8x128xf32> -> vector<8x128xf32>
    %8 = arith.index_cast %arg0 : i32 to index
    %c0_5 = arith.constant 0 : index
    %c0_6 = arith.constant 0 : index
    %9 = vector.load %arg3[%8, %c0_5, %c0_6] : memref<3x1x128xf32, #tpu.memory_space<vmem>>, vector<1x1x128xf32>
    %10 = vector.shape_cast %9 : vector<1x1x128xf32> to vector<1x128xf32>
    %11 = vector.broadcast %10 : vector<1x128xf32> to vector<8x128xf32>
    %12 = arith.addf %7, %11 : vector<8x128xf32>
    %c2_i32 = arith.constant 2 : i32
    %13 = arith.cmpi slt, %arg0, %c2_i32 : i32
    %14 = arith.extui %13 : i1 to i32
    %c0_i32_7 = arith.constant 0 : i32
    %15 = arith.cmpi ne, %14, %c0_i32_7 : i32
    scf.if %15 {
      %cst_10 = arith.constant 0.000000e+00 : f32
      %19 = vector.broadcast %cst_10 : f32 to vector<8x128xf32>
      %20 = arith.maximumf %12, %19 : vector<8x128xf32>
      %c0_11 = arith.constant 0 : index
      %c0_12 = arith.constant 0 : index
      %21 = vector.load %arg5[%c0_11, %c0_12] : memref<8x128xf32, #tpu.memory_space<vmem>>, vector<8x128xf32>
      tpu.vector_store %arg5[%c0_11, %c0_12], %20 {strides = array<i32>} : memref<8x128xf32, #tpu.memory_space<vmem>>, vector<8x128xf32>,
    } else {
    }
    %c2_i32_8 = arith.constant 2 : i32
    %16 = arith.cmpi eq, %arg0, %c2_i32_8 : i32
    %17 = arith.extui %16 : i1 to i32
    %c0_i32_9 = arith.constant 0 : i32
    %18 = arith.cmpi ne, %17, %c0_i32_9 : i32
    scf.if %18 {
      %19 = vector.extract_strided_slice %12 {offsets = [0, 0], sizes = [8, 16], strides = [1, 1]} : vector<8x128xf32> to vector<8x16xf32>
      %c0_10 = arith.constant 0 : index
      %c0_11 = arith.constant 0 : index
      %20 = vector.load %arg4[%c0_10, %c0_11] : memref<8x16xf32, #tpu.memory_space<vmem>>, vector<8x16xf32>
      tpu.vector_store %arg4[%c0_10, %c0_11], %19 {strides = array<i32>} : memref<8x16xf32, #tpu.memory_space<vmem>>, vector<8x16xf32>,
    } else {
    }
    return
  }
  func.func @transform_0(%arg0: i32) -> (i32, i32) {
    %c0_i32 = arith.constant 0 : i32
    %c0_i32_0 = arith.constant 0 : i32
    %c0_i32_1 = arith.constant 0 : i32
    return %c0_i32, %c0_i32_0 : i32, i32
  }
  func.func @transform_1(%arg0: i32) -> (i32, i32, i32) {
    %c0_i32 = arith.constant 0 : i32
    %c0_i32_0 = arith.constant 0 : i32
    %c0_i32_1 = arith.constant 0 : i32
    return %arg0, %c0_i32, %c0_i32_0 : i32, i32, i32
  }
  func.func @transform_2(%arg0: i32) -> (i32, i32, i32) {
    %c0_i32 = arith.constant 0 : i32
    %c0_i32_0 = arith.constant 0 : i32
    %c0_i32_1 = arith.constant 0 : i32
    %c0_i32_2 = arith.constant 0 : i32
    return %c0_i32, %c0_i32_0, %c0_i32_1 : i32, i32, i32
  }
  func.func @transform_3(%arg0: i32) -> (i32, i32) {
    %c0_i32 = arith.constant 0 : i32
    %c0_i32_0 = arith.constant 0 : i32
    %c0_i32_1 = arith.constant 0 : i32
    return %c0_i32, %c0_i32_0 : i32, i32
  }
}

</mosaic_0001>

<llo_original>
// kernel: mlp_forward.1
$region0: #{mlp_forward.1}
  #allocation0 [shape = 'u32[]', space=smem, size = 0x4, offset = 0x4, fixed_abs, tag = 'smem constant byte address 0x4 - core index']
  #allocation1 [shape = 'u32[72,128]{1,0:T(1,128)}', space=vmem, size = 0x9000, scoped, tag = 'internal scratch']
  #allocation2 [shape = 'f32[8,128]{1,0:T(8,128)}', space=vmem, size = 0x1000, scoped, tag = 'scratch operand']
  %s0 = inlined_call_operand.hbm [shape: f32[8,32], index: 0, kind: input, shape index: {}]
  %s1 = inlined_call_operand.hbm [shape: bf16[3,128,128], index: 1, kind: input, shape index: {}]
  %s2 = inlined_call_operand.hbm [shape: f32[3,1,128], index: 2, kind: input, shape index: {}]
  %s3 = inlined_call_operand.hbm [shape: f32[8,16], index: 3, kind: output, shape index: {}]
  %s4 = sld [smem:[#allocation0]]
  $region69: #{mlp_forward.1} parent=0
    _
  %s6 = ssub.s32 1, %s4
  %s7 = scalar_select 0, %s6, %s4
  $region1: #{mlp_forward.1} parent=0
    #allocation3 [shape = 'u8[4096]{0}', space=vmem, size = 0x1000, scoped, tag = 'input window, operand 0, single buffered']
    #allocation4 [shape = 's32[2]{0}', space=sflag, size = 0x8, scoped, tag = 'scoped memory for mlp_forward.1']
    #allocation5 [shape = 's32[2]{0}', space=sflag, size = 0x8, scoped, tag = 'scoped memory for mlp_forward.1']
    #allocation6 [shape = 'u8[65536]{0}', space=vmem, size = 0x10000, scoped, tag = 'input window, operand 1']
    #allocation7 [shape = 's32[2]{0}', space=sflag, size = 0x8, scoped, tag = 'scoped memory for mlp_forward.1']
    #allocation8 [shape = 'u8[1536]{0}', space=vmem, size = 0x800, scoped, tag = 'input window, operand 2, single buffered']
    #allocation9 [shape = 'u8[4096]{0}', space=vmem, size = 0x1000, scoped, tag = 'output window, operand 0, single buffered']
    %8 = vsyncpa [#allocation4], 0
    %9 = vsyncpa [#allocation7], 0
    %s10 = scalar_lea.sflag [#allocation7], 1
    %11 = vsyncpa %s10, 0
    %12 = vsyncpa [#allocation5], 0
    loop: start=0, step=1, limit=5
    $region2: #{mlp_forward.1} parent=1 // loop_pre_header
      _
    $region3: #{mlp_forward.1} parent=1 // loop_header
      %s14 = sphi 0, %s18
      %p15 = scmp.ge.s32.totalorder %s14, 5
      %s22 = sphi 0, %s22
      %s24 = sphi 0, %s22
      %s25 = sphi 0, %s24
      %s39 = sphi 0, %s25
      %s45 = sphi 0, %s47
      %s48 = sphi 0, %s45
      %s49 = sphi 0, %s48
      %s65 = sphi 0, %s49
      %s69 = sphi 0, %s69
      %s71 = sphi 0, %s69
      %s72 = sphi 0, %s71
      %s86 = sphi 0, %s72
      %s90 = sphi 0, %s90
      %s92 = sphi 0, %s90
      %s93 = sphi 0, %s92
      %s107 = sphi 0, %s93
    $region4: #{mlp_forward.1} parent=1 // loop_header_branch
      %17 = sbr.rel (%p15) target = $region8
    $region5: #{mlp_forward.1} parent=1 // loop_body
      %s19 = ssub.s32 %s14, 1
      %s20 = ssub.s32 %s14, 2
      %s21 = sadd.s32 %s14, 1
      %s23 = sadd.s32 %s22, 1
      %p26 = scmp.eq.s32.totalorder %s14, 2
      %p27 = scmp.ne.s32.totalorder %s22, %s24
      %p28 = scmp.eq.s32.totalorder %s14, 0
      %p29 = por %p27, %p28
      %p30 = scmp.ne.s32.totalorder %s22, %s24
      %p31 = scmp.eq.s32.totalorder %s19, 2
      %p32 = por %p30, %p31
      %p33 = scmp.ne.s32.totalorder %s24, %s25
      %p34 = scmp.eq.s32.totalorder %s19, 0
      %p35 = por %p33, %p34
      %p36 = scmp.ne.s32.totalorder %s24, %s25
      %p37 = scmp.eq.s32.totalorder %s20, 2
      %p38 = por %p36, %p37
      %p40 = scmp.ne.s32.totalorder %s25, %s39
      %p41 = scmp.eq.s32.totalorder %s20, 0
      %p42 = por %p40, %p41
      %s43 = ssub.s32 %s14, %s21
      %p44 = scmp.eq.s32.totalorder %s43, 0
      %s46 = sadd.s32 %s45, 1
      %s47 = scalar_select %p44, %s45, %s46
      %p50 = pneg %p44
      %p51 = scmp.eq.s32.totalorder %s14, 2
      %p52 = por %p50, %p51
      %p53 = scmp.ne.s32.totalorder %s45, %s48
      %p54 = scmp.eq.s32.totalorder %s14, 0
      %p55 = por %p53, %p54
      %p56 = scmp.ne.s32.totalorder %s45, %s48
      %p57 = scmp.eq.s32.totalorder %s19, 2
      %p58 = por %p56, %p57
      %p59 = scmp.ne.s32.totalorder %s48, %s49
      %p60 = scmp.eq.s32.totalorder %s19, 0
      %p61 = por %p59, %p60
      %p62 = scmp.ne.s32.totalorder %s48, %s49
      %p63 = scmp.eq.s32.totalorder %s20, 2
      %p64 = por %p62, %p63
      %p66 = scmp.ne.s32.totalorder %s49, %s65
      %p67 = scmp.eq.s32.totalorder %s20, 0
      %p68 = por %p66, %p67
      %s70 = sadd.s32 %s69, 1
      %p73 = scmp.eq.s32.totalorder %s14, 2
      %p74 = scmp.ne.s32.totalorder %s69, %s71
      %p75 = scmp.eq.s32.totalorder %s14, 0
      %p76 = por %p74, %p75
      %p77 = scmp.ne.s32.totalorder %s69, %s71
      %p78 = scmp.eq.s32.totalorder %s19, 2
      %p79 = por %p77, %p78
      %p80 = scmp.ne.s32.totalorder %s71, %s72
      %p81 = scmp.eq.s32.totalorder %s19, 0
      %p82 = por %p80, %p81
      %p83 = scmp.ne.s32.totalorder %s71, %s72
      %p84 = scmp.eq.s32.totalorder %s20, 2
      %p85 = por %p83, %p84
      %p87 = scmp.ne.s32.totalorder %s72, %s86
      %p88 = scmp.eq.s32.totalorder %s20, 0
      %p89 = por %p87, %p88
      %s91 = sadd.s32 %s90, 1
      %p94 = scmp.eq.s32.totalorder %s14, 2
      %p95 = scmp.ne.s32.totalorder %s90, %s92
      %p96 = scmp.eq.s32.totalorder %s14, 0
      %p97 = por %p95, %p96
      %p98 = scmp.ne.s32.totalorder %s90, %s92
      %p99 = scmp.eq.s32.totalorder %s19, 2
      %p100 = por %p98, %p99
      %p101 = scmp.ne.s32.totalorder %s92, %s93
      %p102 = scmp.eq.s32.totalorder %s19, 0
      %p103 = por %p101, %p102
      %p104 = scmp.ne.s32.totalorder %s92, %s93
      %p105 = scmp.eq.s32.totalorder %s20, 2
      %p106 = por %p104, %p105
      %p108 = scmp.ne.s32.totalorder %s93, %s107
      %p109 = scmp.eq.s32.totalorder %s20, 0
      %p110 = por %p108, %p109
      %p111 = scmp.le.s32.totalorder 1, %s14
      %p112 = scmp.lt.s32.totalorder %s14, 4
      %p113 = pnand %p111, %p112
      %p114 = pneg %p113
      // Predicated region
      $region9: #{mlp_forward.1} parent=5 // pred_check
        _
      $region10: #{mlp_forward.1} parent=5 // pred_check_branch
        %116 = sbr.rel (%p113) target = $region12
      $region11: #{mlp_forward.1} parent=5 // pred_region
        %s117 = ssub.s32 %s14, 1
        // Predicated region
        $region13: #{mlp_forward.1} parent=11 // pred_check
          %p118 = pneg %p35
        $region14: #{mlp_forward.1} parent=11 // pred_check_branch
          %120 = sbr.rel (%p118) target = $region16
        $region15: #{mlp_forward.1} parent=11 // pred_region
          %122 = vsyncadd [#allocation4], 0
          %s124 = sshll.u32 %s0, 4
          %s125 = int_to_ptr.hbm [resolvable:$true] %s124
          %s126 = sshll.u32 [#allocation3], 4
          %s127 = int_to_ptr.vmem [resolvable:$true] %s126
          %129 = dma.hbm_to_vmem [thread:$0]  %s125, 128, %s127, [#allocation4]
        $region16: #{mlp_forward.1} parent=11 // pred_fallthru
          _
        // Predicated region
        $region17: #{mlp_forward.1} parent=11 // pred_check
          %p130 = pneg %p82
        $region18: #{mlp_forward.1} parent=11 // pred_check_branch
          %132 = sbr.rel (%p130) target = $region20
        $region19: #{mlp_forward.1} parent=11 // pred_region
          %134 = vsyncadd [#allocation7], 0
          %s135 = sshll.u32 %s2, 4
          %s136 = int_to_ptr.hbm [resolvable:$true] %s135
          %s137 = sshll.u32 [#allocation8], 4
          %s138 = int_to_ptr.vmem [resolvable:$true] %s137
          %143 = dma.hbm_to_vmem [thread:$0]  %s136, 48, %s138, [#allocation7], 16, 16, 1
        $region20: #{mlp_forward.1} parent=11 // pred_fallthru
          _
      $region12: #{mlp_forward.1} parent=5 // pred_fallthru
        _
      %p144 = scmp.lt.s32.totalorder %s14, 3
      // Predicated region
      $region21: #{mlp_forward.1} parent=5 // pred_check
        %p145 = pneg %p144
      $region22: #{mlp_forward.1} parent=5 // pred_check_branch
        %147 = sbr.rel (%p145) target = $region24
      $region23: #{mlp_forward.1} parent=5 // pred_region
        // Predicated region
        $region25: #{mlp_forward.1} parent=23 // pred_check
          %p148 = pneg %p55
        $region26: #{mlp_forward.1} parent=23 // pred_check_branch
          %150 = sbr.rel (%p148) target = $region28
        $region27: #{mlp_forward.1} parent=23 // pred_region
          %s151 = sand.u32 %s14, 1
          %s152 = scalar_lea.sflag [#allocation7], %s151
          %s153 = sand.u32 %s45, 1
          %s154 = smul.addr %s153, 64
          %s155 = scalar_lea.vmem [#allocation6], %s154
          %157 = vsyncadd %s152, 0
          %s158 = smul.addr %s14, 16
          %s159 = smul.addr %s158, 4
          %s160 = scalar_lea.hbm %s1, %s159
          %s161 = sshll.u32 %s160, 4
          %s162 = int_to_ptr.hbm [resolvable:$true] %s161
          %s163 = sshll.u32 %s155, 4
          %s164 = int_to_ptr.vmem [resolvable:$true] %s163
          %169 = dma.hbm_to_vmem [thread:$0]  %s162, 1024, %s164, %s152, 64, 64, 4
        $region28: #{mlp_forward.1} parent=23 // pred_fallthru
          _
      $region24: #{mlp_forward.1} parent=5 // pred_fallthru
        _
      %p170 = scmp.le.s32.totalorder 1, %s14
      %p171 = scmp.lt.s32.totalorder %s14, 4
      %p172 = pnand %p170, %p171
      %p173 = pneg %p172
      // Predicated region
      $region29: #{mlp_forward.1} parent=5 // pred_check
        _
      $region30: #{mlp_forward.1} parent=5 // pred_check_branch
        %175 = sbr.rel (%p172) target = $region32
      $region31: #{mlp_forward.1} parent=5 // pred_region
        %s176 = ssub.s32 %s14, 1
        // Predicated region
        $region33: #{mlp_forward.1} parent=31 // pred_check
          %p177 = pneg %p35
        $region34: #{mlp_forward.1} parent=31 // pred_check_branch
          %179 = sbr.rel (%p177) target = $region36
        $region35: #{mlp_forward.1} parent=31 // pred_region
          %181 = dma.done [#allocation4], 128
        $region36: #{mlp_forward.1} parent=31 // pred_fallthru
          _
        %s182 = sand.u32 %s19, 1
        %s183 = scalar_lea.sflag [#allocation7], %s182
        %s184 = sand.u32 %s48, 1
        %s185 = smul.addr %s184, 64
        %s186 = scalar_lea.vmem [#allocation6], %s185
        // Predicated region
        $region37: #{mlp_forward.1} parent=31 // pred_check
          %p187 = pneg %p61
        $region38: #{mlp_forward.1} parent=31 // pred_check_branch
          %189 = sbr.rel (%p187) target = $region40
        $region39: #{mlp_forward.1} parent=31 // pred_region
          %191 = dma.done %s183, 1024
        $region40: #{mlp_forward.1} parent=31 // pred_fallthru
          _
        // Predicated region
        $region41: #{mlp_forward.1} parent=31 // pred_check
          %p192 = pneg %p82
        $region42: #{mlp_forward.1} parent=31 // pred_check_branch
          %194 = sbr.rel (%p192) target = $region44
        $region43: #{mlp_forward.1} parent=31 // pred_region
          %196 = dma.done [#allocation7], 48
        $region44: #{mlp_forward.1} parent=31 // pred_fallthru
          _
        %p197 = pneg %p35
        %p198 = pneg %p32
        %s199 = sand.u32 %s19, 1
        %s200 = scalar_lea.sflag [#allocation7], %s199
        %s201 = sand.u32 %s48, 1
        %s202 = smul.addr %s201, 64
        %s203 = scalar_lea.vmem [#allocation6], %s202
        %p204 = pneg %p61
        %p205 = pneg %p58
        %p206 = pneg %p82
        %p207 = pneg %p79
        %p208 = pneg %p103
        %p209 = pneg %p100
        %p210 = scmp.eq.s32.totalorder %s19, 0
        // Predicated region
        $region45: #{mlp_forward.1} parent=31 // pred_check
          %p211 = pneg %p210
        $region46: #{mlp_forward.1} parent=31 // pred_check_branch
          %213 = sbr.rel (%p211) target = $region48
        $region47: #{mlp_forward.1} parent=31 // pred_region
          %214 = vst [vmem:[#allocation2] sm:$0xff] 0.0
          %v215 = vld [vmem:[#allocation3] sm:$0xff]
          %vm216 = vcmask 261120
          %217 = vst.msk [vmem:[#allocation2] sm:$0xff] %vm216, %v215
        $region48: #{mlp_forward.1} parent=31 // pred_fallthru
          _
        %v218 = vld [vmem:[#allocation2] sm:$0xff]
        %v219 = vpack.c.bf16 %v218, %v218
        %v220 = vld [vmem:[%s186] sm:$0xf]
        %v221 = vld [vmem:[%s186 + $0x4] sm:$0xf]
        %v222 = vld [vmem:[%s186 + $0x8] sm:$0xf]
        %v223 = vld [vmem:[%s186 + $0xc] sm:$0xf]
        %v224 = vld [vmem:[%s186 + $0x10] sm:$0xf]
        %v225 = vld [vmem:[%s186 + $0x14] sm:$0xf]
        %v226 = vld [vmem:[%s186 + $0x18] sm:$0xf]
        %v227 = vld [vmem:[%s186 + $0x1c] sm:$0xf]
        %v228 = vld [vmem:[%s186 + $0x20] sm:$0xf]
        %v229 = vld [vmem:[%s186 + $0x24] sm:$0xf]
        %v230 = vld [vmem:[%s186 + $0x28] sm:$0xf]
        %v231 = vld [vmem:[%s186 + $0x2c] sm:$0xf]
        %v232 = vld [vmem:[%s186 + $0x30] sm:$0xf]
        %v233 = vld [vmem:[%s186 + $0x34] sm:$0xf]
        %v234 = vld [vmem:[%s186 + $0x38] sm:$0xf]
        %v235 = vld [vmem:[%s186 + $0x3c] sm:$0xf]
        %s236 = scalar_lea.vmem [#allocation8], %s19
        %v237 = vld [vmem:[%s236] sm:$0x1]
        %v239 = vperm.slane %v237, 0
        %v257 = vunpack.c.l.b16 %v220
        %v258 = vunpack.c.l.b16 %v221
        %v259 = vunpack.c.l.b16 %v222
        %v260 = vunpack.c.l.b16 %v223
        %v261 = vunpack.c.l.b16 %v224
        %v262 = vunpack.c.l.b16 %v225
        %v263 = vunpack.c.l.b16 %v226
        %v264 = vunpack.c.l.b16 %v227
        %v265 = vunpack.c.l.b16 %v228
        %v266 = vunpack.c.l.b16 %v229
        %v267 = vunpack.c.l.b16 %v230
        %v268 = vunpack.c.l.b16 %v231
        %v269 = vunpack.c.l.b16 %v232
        %v270 = vunpack.c.l.b16 %v233
        %v271 = vunpack.c.l.b16 %v234
        %v272 = vunpack.c.l.b16 %v235
        %v273 = vpack.c.b16 %v258, %v257
        %v274 = vpack.c.b16 %v260, %v259
        %v275 = vpack.c.b16 %v262, %v261
        %v276 = vpack.c.b16 %v264, %v263
        %v277 = vpack.c.b16 %v266, %v265
        %v278 = vpack.c.b16 %v268, %v267
        %v279 = vpack.c.b16 %v270, %v269
        %v280 = vpack.c.b16 %v272, %v271
        %289 = vmatpush.bf16.msra.mxu0 %v280
        %290 = vmatpush.bf16.msra.mxu0 %v279
        %291 = vmatpush.bf16.msra.mxu0 %v278
        %292 = vmatpush.bf16.msra.mxu0 %v277
        %293 = vmatpush.bf16.msra.mxu0 %v276
        %294 = vmatpush.bf16.msra.mxu0 %v275
        %295 = vmatpush.bf16.msra.mxu0 %v274
        %296 = vmatpush.bf16.msra.mxu0 %v273
        %297 = vmatmul.bf16.gmra.mxu0 %v219
        %v298 = vpop.f32.mrf.mxu0
        %v299 = vadd.f32 %v239, %v298
        %v300 = vpop.f32.mrf.mxu0
        %301 = vdwg.mxu0
        %p302 = scmp.lt.s32.totalorder %s19, 2
        // Predicated region
        $region49: #{mlp_forward.1} parent=31 // pred_check
          %p303 = pneg %p302
        $region50: #{mlp_forward.1} parent=31 // pred_check_branch
          %305 = sbr.rel (%p303) target = $region52
        $region51: #{mlp_forward.1} parent=31 // pred_region
          %v306 = vmax.f32 %v299, 0.0
          %307 = vst [vmem:[#allocation2] sm:$0xff] %v306
        $region52: #{mlp_forward.1} parent=31 // pred_fallthru
          _
        %p308 = scmp.eq.s32.totalorder %s19, 2
        // Predicated region
        $region53: #{mlp_forward.1} parent=31 // pred_check
          %p309 = pneg %p308
        $region54: #{mlp_forward.1} parent=31 // pred_check_branch
          %311 = sbr.rel (%p309) target = $region56
        $region55: #{mlp_forward.1} parent=31 // pred_region
          %vm312 = vcmask 130048
          %313 = vst.msk [vmem:[#allocation9] sm:$0xff] %vm312, %v299
        $region56: #{mlp_forward.1} parent=31 // pred_fallthru
          _
        // Predicated region
        $region57: #{mlp_forward.1} parent=31 // pred_check
          %p314 = pneg %p100
        $region58: #{mlp_forward.1} parent=31 // pred_check_branch
          %316 = sbr.rel (%p314) target = $region60
        $region59: #{mlp_forward.1} parent=31 // pred_region
          %318 = vsyncadd [#allocation5], 0
          %s320 = sshll.u32 [#allocation9], 4
          %s321 = int_to_ptr.vmem [resolvable:$true] %s320
          %s322 = sshll.u32 %s3, 4
          %s323 = int_to_ptr.hbm [resolvable:$true] %s322
          %325 = dma.vmem_to_hbm [thread:$0]  %s321, 128, %s323, [#allocation5]
        $region60: #{mlp_forward.1} parent=31 // pred_fallthru
          _
        // Predicated region
        $region61: #{mlp_forward.1} parent=31 // pred_check
          %p326 = pneg %p100
        $region62: #{mlp_forward.1} parent=31 // pred_check_branch
          %328 = sbr.rel (%p326) target = $region64
        $region63: #{mlp_forward.1} parent=31 // pred_region
          %330 = dma.done [#allocation5], 128
        $region64: #{mlp_forward.1} parent=31 // pred_fallthru
          _
      $region32: #{mlp_forward.1} parent=5 // pred_fallthru
        _
      %p331 = scmp.le.s32.totalorder 2, %s14
      // Predicated region
      $region65: #{mlp_forward.1} parent=5 // pred_check
        %p332 = pneg %p331
      $region66: #{mlp_forward.1} parent=5 // pred_check_branch
        %334 = sbr.rel (%p332) target = $region68
      $region67: #{mlp_forward.1} parent=5 // pred_region
        %s335 = ssub.s32 %s14, 2
      $region68: #{mlp_forward.1} parent=5 // pred_fallthru
        _
    $region6: #{mlp_forward.1} parent=1 // loop_footer
      %s18 = sadd.s32 1, %s14
    $region7: #{mlp_forward.1} parent=1 // loop_footer_branch
      %13 = sbr.rel target = $region3
    $region8: #{mlp_forward.1} parent=1 // loop_exit
      _
    %336 = vsyncpa [#allocation4], 1
    %s337 = scalar_lea.sflag [#allocation4], 1
    %338 = vsyncpa %s337, 1
    %339 = vsyncpa [#allocation7], 1
    %s340 = scalar_lea.sflag [#allocation7], 1
    %341 = vsyncpa %s340, 1
    %342 = vsyncpa [#allocation5], 1
    %s343 = scalar_lea.sflag [#allocation5], 1
    %344 = vsyncpa %s343, 1

</llo_original>
